<compile_context>
chip_gen: v6e
topology: v6e:2x2x1
jax: 0.10.0
libtpu: 0.0.40
codegen_flags: <defaults>
</compile_context>

<pallas_src>
import jax
import jax.numpy as jnp
from jax import lax
from jax.experimental import pallas as pl
from jax.experimental.pallas import tpu as pltpu

C_IN, C_MID1, C_MID2, C_OUT = 256, 64, 16, 1
LN_EPS = 1e-6
LANE = 128
DEFAULT_TN = 2048   # upper bound on pixels per lane tile
MIN_TN = 512        # never shrink lane tiles below this (v5e HBM roofline)


def _gelu_exact(x):
    # nn.GELU() default: 0.5 * x * (1 + erf(x / sqrt(2)))
    return 0.5 * x * (1.0 + lax.erf(x * (1.0 / jnp.sqrt(2.0).astype(x.dtype))))


def spgen_kernel(x_ref, w1_ref, aux1_ref, w2_ref, aux2_ref, o_ref):
    # x block: (256, tn) -- channels on sublanes, pixels on lanes (f32).
    x = x_ref[...]

    aux1 = aux1_ref[...]                      # (64, 3): [b1', gamma1, beta1]
    b1, g1, be1 = aux1[:, 0:1], aux1[:, 1:2], aux1[:, 2:3]

    # Conv2d(256->64, 1x1) with LN-mean pre-folded into (w1, b1):
    # h is already (analytically) zero-mean over channels.
    h = jnp.dot(w1_ref[...], x, preferred_element_type=jnp.float32) + b1
    s = jnp.mean(h * h, axis=0, keepdims=True)            # biased variance
    h = _gelu_exact(h * lax.rsqrt(s + LN_EPS) * g1 + be1)

    aux2 = aux2_ref[...]                      # (16, 5): [b2', gamma2, beta2, w3col, b3]
    b2, g2, be2 = aux2[:, 0:1], aux2[:, 1:2], aux2[:, 2:3]
    w3, b3 = aux2[:, 3:4], aux2[0:1, 4:5]

    # Conv2d(64->16, 1x1), LN-mean pre-folded.
    h = jnp.dot(w2_ref[...], h, preferred_element_type=jnp.float32) + b2
    s = jnp.mean(h * h, axis=0, keepdims=True)
    h = _gelu_exact(h * lax.rsqrt(s + LN_EPS) * g2 + be2)

    # Conv2d(16->1, 1x1): broadcast-multiply + sublane reduce (VPU/XLU) instead
    # of a 1-row MXU push; lane-dense (1, tn) result.
    o = jnp.sum(h * w3, axis=0, keepdims=True) + b3
    o_ref[...] = o.astype(o_ref.dtype)


def spgen_pallas(x_bcp, packed, *, tn):
    """x_bcp: (B, 256, P) float32.  Returns (B, 1, P) float32.

    P need NOT be a multiple of tn: the last lane tile is a masked partial
    block (per-pixel op => padded lanes only produce discarded garbage).
    """
    b, c, p = x_bcp.shape
    assert c == C_IN and tn % LANE == 0
    w1, aux1, w2, aux2 = packed

    def full2d(a):
        return pl.BlockSpec(a.shape, lambda bi, j: (0, 0))

    return pl.pallas_call(
        spgen_kernel,
        out_shape=jax.ShapeDtypeStruct((b, C_OUT, p), jnp.float32),
        grid_spec=pltpu.PrefetchScalarGridSpec(
            num_scalar_prefetch=0,
            grid=(b, pl.cdiv(p, tn)),
            in_specs=[
                # batch dim squeezed; kernel sees a (256, tn) block.
                pl.BlockSpec((None, C_IN, tn), lambda bi, j: (bi, 0, j)),
                full2d(w1), full2d(aux1), full2d(w2), full2d(aux2),
            ],
            # lane-dense (1, tn) output block (unmasked full-width stores
            # except for the ragged tail, which Pallas masks).
            out_specs=pl.BlockSpec((None, C_OUT, tn), lambda bi, j: (bi, 0, j)),
        ),
        compiler_params=pltpu.CompilerParams(
            dimension_semantics=("parallel", "parallel"),
            # Actual use at tn<=2048 is ~6 MiB; 48 MiB cap leaves headroom and
            # stays under physical VMEM on all generations (64 MiB/TC on v7x).
            vmem_limit_bytes=48 * 1024 * 1024,
        ),
    )(x_bcp, w1, aux1, w2, aux2)


def _round_up(x, m):
    return (x + m - 1) // m * m


def _choose_tn(hw):
    """Lane-tile width: big enough for HBM roofline, small enough that the
    grid has >= ~8 pixel tiles (double-buffer overlap + both v7x TCs fed)."""
    p128 = _round_up(hw, LANE)
    tn = _round_up(max(p128 // 8, MIN_TN), LANE)
    return min(tn, DEFAULT_TN, p128)


@jax.jit
def spgen_forward(x_nchw, packed_params):
    """Full forward matching PyTorch: x (B, 256, H, W) -> (B, 1, H, W)."""
    b, c, h, w = x_nchw.shape
    hw = h * w
    tn = _choose_tn(hw)                      # static under jit (shape-derived)
    # NCHW -> (B, C, H*W) is a free contiguous reshape (no transpose, no pad).
    x = x_nchw.reshape(b, c, hw)
    o = spgen_pallas(x, packed_params, tn=tn)   # (B, 1, HW)
    # Keep this slice: with ragged grids the masked tail lanes are garbage.
    return o[:, :, :hw].reshape(b, C_OUT, h, w)


def init_params(key):
    """Deterministic synthetic parameters matching the PyTorch module shapes.

    Conv weights stored as (Cout, Cin) matrices (1x1 kernels squeezed);
    biases / LN affine as (C, 1) columns.  Final conv weight as a (16, 1) col.
    """
    ks = jax.random.split(key, 6)

    def conv_w(k, cout, cin):
        bound = 1.0 / jnp.sqrt(cin)
        return jax.random.uniform(k, (cout, cin), jnp.float32, -bound, bound)

    def conv_b(k, cout, cin):
        bound = 1.0 / jnp.sqrt(cin)
        return jax.random.uniform(k, (cout, 1), jnp.float32, -bound, bound)

    w1 = conv_w(ks[0], C_MID1, C_IN)             # (64, 256)
    b1 = conv_b(ks[1], C_MID1, C_IN)             # (64, 1)
    g1 = jnp.ones((C_MID1, 1), jnp.float32)      # LayerNorm2d(64) weight
    be1 = jnp.zeros((C_MID1, 1), jnp.float32)    # LayerNorm2d(64) bias
    w2 = conv_w(ks[2], C_MID2, C_MID1)           # (16, 64)
    b2 = conv_b(ks[3], C_MID2, C_MID1)           # (16, 1)
    g2 = jnp.ones((C_MID2, 1), jnp.float32)      # LayerNorm2d(16) weight
    be2 = jnp.zeros((C_MID2, 1), jnp.float32)    # LayerNorm2d(16) bias
    w3 = conv_w(ks[4], C_OUT, C_MID2).T          # (16, 1)
    b3 = conv_b(ks[5], C_OUT, C_MID2)            # (1, 1)
    return (w1, b1, g1, be1, w2, b2, g2, be2, w3, b3)


def prepare_params(params):
    """One-time transform of raw (PyTorch-layout) params into kernel inputs.

    Folds the LayerNorm mean-subtraction into the preceding 1x1 conv
    (exact algebra: mean_c(Wx+b) = mean_rows(W)x + mean(b)) and packs the tiny
    per-channel vectors into two aux blocks.
    """
    (w1, b1, g1, be1, w2, b2, g2, be2, w3, b3) = params
    w1c = w1 - jnp.mean(w1, axis=0, keepdims=True)
    b1c = b1 - jnp.mean(b1)
    w2c = w2 - jnp.mean(w2, axis=0, keepdims=True)
    b2c = b2 - jnp.mean(b2)
    aux1 = jnp.concatenate([b1c, g1, be1], axis=1)                       # (64, 3)
    aux2 = jnp.concatenate(
        [b2c, g2, be2, w3, jnp.broadcast_to(b3, (C_MID2, 1))], axis=1)   # (16, 5)
    return (w1c, aux1, w2c, aux2)


def spgen_reference(x_nchw, params):
    """Pure-JAX reference of the PyTorch math (raw params, explicit LN mean)."""
    (w1, b1, g1, be1, w2, b2, g2, be2, w3, b3) = params
    b, c, hh, ww = x_nchw.shape
    x = jnp.transpose(x_nchw, (0, 2, 3, 1)).reshape(-1, c)  # (N, 256)

    def ln(h, g, be):
        u = jnp.mean(h, axis=-1, keepdims=True)
        d = h - u
        s = jnp.mean(d * d, axis=-1, keepdims=True)
        return d * lax.rsqrt(s + LN_EPS) * g[:, 0] + be[:, 0]

    h = x @ w1.T + b1[:, 0]
    h = _gelu_exact(ln(h, g1, be1))
    h = h @ w2.T + b2[:, 0]
    h = _gelu_exact(ln(h, g2, be2))
    o = h @ w3 + b3[0, 0]                        # (N, 1)
    return jnp.transpose(o.reshape(b, hh, ww, C_OUT), (0, 3, 1, 2))


if __name__ == "__main__":
    key = jax.random.PRNGKey(0)
    k_param, k_x1, k_x2 = jax.random.split(key, 3)

    raw_params = init_params(k_param)
    packed = prepare_params(raw_params)

    # Case 1: small, lane-aligned pixel count (Cin fixed at 256 by the module).
    x1 = jax.random.normal(k_x1, (2, 256, 16, 16), jnp.float32)
    out1 = jax.block_until_ready(spgen_forward(x1, packed))
    assert out1.shape == (2, 1, 16, 16), out1.shape
    ref1 = spgen_reference(x1, raw_params)
    err1 = float(jnp.max(jnp.abs(out1 - ref1)))
    assert jnp.allclose(out1, ref1, atol=1e-4, rtol=1e-4), err1

    # Case 2: ragged pixel count (exercises the masked partial last block).
    x2 = jax.random.normal(k_x2, (1, 256, 10, 10), jnp.float32)
    out2 = jax.block_until_ready(spgen_forward(x2, packed))
    assert out2.shape == (1, 1, 10, 10), out2.shape
    ref2 = spgen_reference(x2, raw_params)
    err2 = float(jnp.max(jnp.abs(out2 - ref2)))
    assert jnp.allclose(out2, ref2, atol=1e-4, rtol=1e-4), err2

    print("KERNEL_OK")
</pallas_src>

<mosaic_0001>
module attributes {stable_mosaic.version = 11 : i64} {
  func.func @spgen_kernel(%arg0: i32, %arg1: i32, %arg2: memref<1x256x256xf32, #tpu.memory_space<vmem>>, %arg3: memref<64x256xf32, #tpu.memory_space<vmem>>, %arg4: memref<64x3xf32, #tpu.memory_space<vmem>>, %arg5: memref<16x64xf32, #tpu.memory_space<vmem>>, %arg6: memref<16x5xf32, #tpu.memory_space<vmem>>, %arg7: memref<1x1x256xf32, #tpu.memory_space<vmem>>) attributes {dimension_semantics = [#tpu.dimension_semantics<parallel>, #tpu.dimension_semantics<parallel>], iteration_bounds = array<i64: 2, 1>, scalar_prefetch = 0 : i64, scratch_operands = 0 : i64, tpu.core_type = #tpu.core_type<tc>, window_params = [{transform_indices = @transform_0, window_bounds = array<i64: 1, 256, 256>}, {pipeline_mode = #tpu.pipeline_mode<synchronous>, transform_indices = @transform_1, window_bounds = array<i64: 64, 256>}, {pipeline_mode = #tpu.pipeline_mode<synchronous>, transform_indices = @transform_2, window_bounds = array<i64: 64, 3>}, {pipeline_mode = #tpu.pipeline_mode<synchronous>, transform_indices = @transform_3, window_bounds = array<i64: 16, 64>}, {pipeline_mode = #tpu.pipeline_mode<synchronous>, transform_indices = @transform_4, window_bounds = array<i64: 16, 5>}, {transform_indices = @transform_5, window_bounds = array<i64: 1, 1, 256>}]} {
    %c0 = arith.constant 0 : index
    %c0_0 = arith.constant 0 : index
    %c0_1 = arith.constant 0 : index
    %0 = vector.load %arg2[%c0, %c0_0, %c0_1] : memref<1x256x256xf32, #tpu.memory_space<vmem>>, vector<1x256x256xf32>
    %1 = vector.shape_cast %0 : vector<1x256x256xf32> to vector<256x256xf32>
    %c0_2 = arith.constant 0 : index
    %c0_3 = arith.constant 0 : index
    %2 = vector.load %arg4[%c0_2, %c0_3] : memref<64x3xf32, #tpu.memory_space<vmem>>, vector<64x3xf32>
    %3 = vector.extract_strided_slice %2 {offsets = [0, 0], sizes = [64, 1], strides = [1, 1]} : vector<64x3xf32> to vector<64x1xf32>
    %4 = vector.extract_strided_slice %2 {offsets = [0, 1], sizes = [64, 1], strides = [1, 1]} : vector<64x3xf32> to vector<64x1xf32>
    %5 = vector.extract_strided_slice %2 {offsets = [0, 2], sizes = [64, 1], strides = [1, 1]} : vector<64x3xf32> to vector<64x1xf32>
    %c0_4 = arith.constant 0 : index
    %c0_5 = arith.constant 0 : index
    %6 = vector.load %arg3[%c0_4, %c0_5] : memref<64x256xf32, #tpu.memory_space<vmem>>, vector<64x256xf32>
    %cst = arith.constant dense<0.000000e+00> : vector<64x256xf32>
    %7 = tpu.matmul %6, %1, %cst {dimension_numbers = #tpu.dot_dimension_numbers<[1], [0], [0], [1], [0, 0, 1, 1], [], []>} : vector<64x256xf32>, vector<256x256xf32>, vector<64x256xf32> -> vector<64x256xf32>
    %8 = vector.broadcast %3 : vector<64x1xf32> to vector<64x256xf32>
    %9 = arith.addf %7, %8 : vector<64x256xf32>
    %10 = arith.mulf %9, %9 : vector<64x256xf32>
    %cst_6 = arith.constant dense<0.000000e+00> : vector<256xf32>
    %11 = vector.multi_reduction <add>, %10, %cst_6 [0] : vector<64x256xf32> to vector<256xf32>
    %12 = vector.shape_cast %11 : vector<256xf32> to vector<1x256xf32>
    %cst_7 = arith.constant 6.400000e+01 : f32
    %13 = vector.broadcast %cst_7 : f32 to vector<1x256xf32>
    %14 = arith.divf %12, %13 : vector<1x256xf32>
    %cst_8 = arith.constant 9.99999997E-7 : f32
    %15 = vector.broadcast %cst_8 : f32 to vector<1x256xf32>
    %16 = arith.addf %14, %15 : vector<1x256xf32>
    %17 = math.rsqrt %16 : vector<1x256xf32>
    %18 = vector.broadcast %17 : vector<1x256xf32> to vector<64x256xf32>
    %19 = arith.mulf %9, %18 : vector<64x256xf32>
    %20 = vector.broadcast %4 : vector<64x1xf32> to vector<64x256xf32>
    %21 = arith.mulf %19, %20 : vector<64x256xf32>
    %22 = vector.broadcast %5 : vector<64x1xf32> to vector<64x256xf32>
    %23 = arith.addf %21, %22 : vector<64x256xf32>
    %cst_9 = arith.constant 5.000000e-01 : f32
    %24 = vector.broadcast %cst_9 : f32 to vector<64x256xf32>
    %25 = arith.mulf %24, %23 : vector<64x256xf32>
    %cst_10 = arith.constant 2.000000e+00 : f32
    %26 = math.sqrt %cst_10 : f32
    %cst_11 = arith.constant 1.000000e+00 : f32
    %27 = arith.divf %cst_11, %26 : f32
    %28 = vector.broadcast %27 : f32 to vector<64x256xf32>
    %29 = arith.mulf %23, %28 : vector<64x256xf32>
    %30 = math.erf %29 : vector<64x256xf32>
    %cst_12 = arith.constant 1.000000e+00 : f32
    %31 = vector.broadcast %cst_12 : f32 to vector<64x256xf32>
    %32 = arith.addf %31, %30 : vector<64x256xf32>
    %33 = arith.mulf %25, %32 : vector<64x256xf32>
    %c0_13 = arith.constant 0 : index
    %c0_14 = arith.constant 0 : index
    %34 = vector.load %arg6[%c0_13, %c0_14] : memref<16x5xf32, #tpu.memory_space<vmem>>, vector<16x5xf32>
    %35 = vector.extract_strided_slice %34 {offsets = [0, 0], sizes = [16, 1], strides = [1, 1]} : vector<16x5xf32> to vector<16x1xf32>
    %36 = vector.extract_strided_slice %34 {offsets = [0, 1], sizes = [16, 1], strides = [1, 1]} : vector<16x5xf32> to vector<16x1xf32>
    %37 = vector.extract_strided_slice %34 {offsets = [0, 2], sizes = [16, 1], strides = [1, 1]} : vector<16x5xf32> to vector<16x1xf32>
    %38 = vector.extract_strided_slice %34 {offsets = [0, 3], sizes = [16, 1], strides = [1, 1]} : vector<16x5xf32> to vector<16x1xf32>
    %39 = vector.extract_strided_slice %34 {offsets = [0, 4], sizes = [1, 1], strides = [1, 1]} : vector<16x5xf32> to vector<1x1xf32>
    %c0_15 = arith.constant 0 : index
    %c0_16 = arith.constant 0 : index
    %40 = vector.load %arg5[%c0_15, %c0_16] : memref<16x64xf32, #tpu.memory_space<vmem>>, vector<16x64xf32>
    %cst_17 = arith.constant dense<0.000000e+00> : vector<16x256xf32>
    %41 = tpu.matmul %40, %33, %cst_17 {dimension_numbers = #tpu.dot_dimension_numbers<[1], [0], [0], [1], [0, 0, 1, 1], [], []>} : vector<16x64xf32>, vector<64x256xf32>, vector<16x256xf32> -> vector<16x256xf32>
    %42 = vector.broadcast %35 : vector<16x1xf32> to vector<16x256xf32>
    %43 = arith.addf %41, %42 : vector<16x256xf32>
    %44 = arith.mulf %43, %43 : vector<16x256xf32>
    %cst_18 = arith.constant dense<0.000000e+00> : vector<256xf32>
    %45 = vector.multi_reduction <add>, %44, %cst_18 [0] : vector<16x256xf32> to vector<256xf32>
    %46 = vector.shape_cast %45 : vector<256xf32> to vector<1x256xf32>
    %cst_19 = arith.constant 1.600000e+01 : f32
    %47 = vector.broadcast %cst_19 : f32 to vector<1x256xf32>
    %48 = arith.divf %46, %47 : vector<1x256xf32>
    %cst_20 = arith.constant 9.99999997E-7 : f32
    %49 = vector.broadcast %cst_20 : f32 to vector<1x256xf32>
    %50 = arith.addf %48, %49 : vector<1x256xf32>
    %51 = math.rsqrt %50 : vector<1x256xf32>
    %52 = vector.broadcast %51 : vector<1x256xf32> to vector<16x256xf32>
    %53 = arith.mulf %43, %52 : vector<16x256xf32>
    %54 = vector.broadcast %36 : vector<16x1xf32> to vector<16x256xf32>
    %55 = arith.mulf %53, %54 : vector<16x256xf32>
    %56 = vector.broadcast %37 : vector<16x1xf32> to vector<16x256xf32>
    %57 = arith.addf %55, %56 : vector<16x256xf32>
    %cst_21 = arith.constant 5.000000e-01 : f32
    %58 = vector.broadcast %cst_21 : f32 to vector<16x256xf32>
    %59 = arith.mulf %58, %57 : vector<16x256xf32>
    %cst_22 = arith.constant 2.000000e+00 : f32
    %60 = math.sqrt %cst_22 : f32
    %cst_23 = arith.constant 1.000000e+00 : f32
    %61 = arith.divf %cst_23, %60 : f32
    %62 = vector.broadcast %61 : f32 to vector<16x256xf32>
    %63 = arith.mulf %57, %62 : vector<16x256xf32>
    %64 = math.erf %63 : vector<16x256xf32>
    %cst_24 = arith.constant 1.000000e+00 : f32
    %65 = vector.broadcast %cst_24 : f32 to vector<16x256xf32>
    %66 = arith.addf %65, %64 : vector<16x256xf32>
    %67 = arith.mulf %59, %66 : vector<16x256xf32>
    %68 = vector.broadcast %38 : vector<16x1xf32> to vector<16x256xf32>
    %69 = arith.mulf %67, %68 : vector<16x256xf32>
    %cst_25 = arith.constant dense<0.000000e+00> : vector<256xf32>
    %70 = vector.multi_reduction <add>, %69, %cst_25 [0] : vector<16x256xf32> to vector<256xf32>
    %71 = vector.shape_cast %70 : vector<256xf32> to vector<1x256xf32>
    %72 = vector.broadcast %39 : vector<1x1xf32> to vector<1x256xf32>
    %73 = arith.addf %71, %72 : vector<1x256xf32>
    %c0_26 = arith.constant 0 : index
    %c0_27 = arith.constant 0 : index
    %c0_28 = arith.constant 0 : index
    %74 = vector.load %arg7[%c0_26, %c0_27, %c0_28] : memref<1x1x256xf32, #tpu.memory_space<vmem>>, vector<1x1x256xf32>
    %75 = vector.shape_cast %74 : vector<1x1x256xf32> to vector<1x256xf32>
    %76 = vector.shape_cast %73 : vector<1x256xf32> to vector<1x1x256xf32>
    tpu.vector_store %arg7[%c0_26, %c0_27, %c0_28], %76 {strides = array<i32>} : memref<1x1x256xf32, #tpu.memory_space<vmem>>, vector<1x1x256xf32>,
    return
  }
  func.func @transform_0(%arg0: i32, %arg1: i32) -> (i32, i32, i32) {
    %c0_i32 = arith.constant 0 : i32
    %c0_i32_0 = arith.constant 0 : i32
    return %arg0, %c0_i32, %arg1 : i32, i32, i32
  }
  func.func @transform_1(%arg0: i32, %arg1: i32) -> (i32, i32) {
    %c0_i32 = arith.constant 0 : i32
    %c0_i32_0 = arith.constant 0 : i32
    %c0_i32_1 = arith.constant 0 : i32
    return %c0_i32, %c0_i32_0 : i32, i32
  }
  func.func @transform_2(%arg0: i32, %arg1: i32) -> (i32, i32) {
    %c0_i32 = arith.constant 0 : i32
    %c0_i32_0 = arith.constant 0 : i32
    %c0_i32_1 = arith.constant 0 : i32
    return %c0_i32, %c0_i32_0 : i32, i32
  }
  func.func @transform_3(%arg0: i32, %arg1: i32) -> (i32, i32) {
    %c0_i32 = arith.constant 0 : i32
    %c0_i32_0 = arith.constant 0 : i32
    %c0_i32_1 = arith.constant 0 : i32
    return %c0_i32, %c0_i32_0 : i32, i32
  }
  func.func @transform_4(%arg0: i32, %arg1: i32) -> (i32, i32) {
    %c0_i32 = arith.constant 0 : i32
    %c0_i32_0 = arith.constant 0 : i32
    %c0_i32_1 = arith.constant 0 : i32
    return %c0_i32, %c0_i32_0 : i32, i32
  }
  func.func @transform_5(%arg0: i32, %arg1: i32) -> (i32, i32, i32) {
    %c0_i32 = arith.constant 0 : i32
    %c0_i32_0 = arith.constant 0 : i32
    return %arg0, %c0_i32, %arg1 : i32, i32, i32
  }
}

</mosaic_0001>

<llo_original>
// kernel: spgen_forward.1
$region0: #{spgen_forward.1}
  #allocation0 [shape = 'u32[]', space=smem, size = 0x4, offset = 0x4, fixed_abs, tag = 'smem constant byte address 0x4 - core index']
  #allocation1 [shape = 'u32[144,128]{1,0:T(1,128)}', space=vmem, size = 0x12000, scoped, tag = 'internal scratch']
  %s0 = inlined_call_operand.vmem [shape: f32[2,256,256], index: 0, kind: input, shape index: {}]
  %s1 = inlined_call_operand.vmem [shape: f32[64,256], index: 1, kind: input, shape index: {}]
  %s2 = inlined_call_operand.vmem [shape: f32[64,3], index: 2, kind: input, shape index: {}]
  %s3 = inlined_call_operand.vmem [shape: f32[16,64], index: 3, kind: input, shape index: {}]
  %s4 = inlined_call_operand.vmem [shape: f32[16,5], index: 4, kind: input, shape index: {}]
  %s5 = inlined_call_operand.vmem [shape: f32[2,1,256], index: 5, kind: output, shape index: {}]
  %s6 = sld [smem:[#allocation0]]
  $region53: #{spgen_forward.1} parent=0
    _
  %s8 = ssub.s32 1, %s6
  %s9 = scalar_select 0, %s8, %s6
  loop: start=0, step=1, limit=4
  $region2: #{spgen_forward.1} parent=0 // loop_pre_header
    _
  $region3: #{spgen_forward.1} parent=0 // loop_header
    %s11 = sphi 0, %s15
    %p12 = scmp.ge.s32.totalorder %s11, 4
    %s18 = sphi 0, %s30
    %s19 = sphi 0, %s26
    %s20 = sphi 0, %s18
    %s21 = sphi 0, %s19
    %s22 = sphi 0, %s20
    %s23 = sphi 0, %s21
    %s35 = sphi 0, %s37
    %s38 = sphi 0, %s35
    %s39 = sphi 0, %s38
    %s55 = sphi 0, %s39
    %s59 = sphi 0, %s59
    %s61 = sphi 0, %s59
    %s62 = sphi 0, %s61
    %s76 = sphi 0, %s62
    %s80 = sphi 0, %s80
    %s82 = sphi 0, %s80
    %s83 = sphi 0, %s82
    %s97 = sphi 0, %s83
    %s101 = sphi 0, %s101
    %s103 = sphi 0, %s101
    %s104 = sphi 0, %s103
    %s118 = sphi 0, %s104
    %s122 = sphi 0, %s122
    %s124 = sphi 0, %s122
    %s125 = sphi 0, %s124
    %s139 = sphi 0, %s125
    %s147 = sphi 0, %s149
    %s150 = sphi 0, %s147
    %s151 = sphi 0, %s150
    %s167 = sphi 0, %s151
  $region4: #{spgen_forward.1} parent=0 // loop_header_branch
    %14 = sbr.rel (%p12) target = $region8
  $region5: #{spgen_forward.1} parent=0 // loop_body
    %s16 = ssub.s32 %s11, 1
    %s17 = ssub.s32 %s11, 2
    %s24 = sadd.s32 1, %s19
    %p25 = scmp.ge.s32.totalorder %s24, 1
    %s26 = scalar_select %p25, 0, %s24
    %s27 = sadd.s32 1, %s18
    %s28 = scalar_select %p25, %s27, %s18
    %p29 = scmp.ge.s32.totalorder %s28, 2
    %s30 = scalar_select %p29, 0, %s28
    %s31 = ssub.s32 %s18, %s30
    %s32 = ssub.s32 %s19, %s26
    %s33 = sor.u32 %s31, %s32
    %p34 = scmp.eq.s32.totalorder %s33, 0
    %s36 = sadd.s32 %s35, 1
    %s37 = scalar_select %p34, %s35, %s36
    %p40 = pneg %p34
    %p41 = scmp.eq.s32.totalorder %s11, 1
    %p42 = por %p40, %p41
    %p43 = scmp.ne.s32.totalorder %s35, %s38
    %p44 = scmp.eq.s32.totalorder %s11, 0
    %p45 = por %p43, %p44
    %p46 = scmp.ne.s32.totalorder %s35, %s38
    %p47 = scmp.eq.s32.totalorder %s16, 1
    %p48 = por %p46, %p47
    %p49 = scmp.ne.s32.totalorder %s38, %s39
    %p50 = scmp.eq.s32.totalorder %s16, 0
    %p51 = por %p49, %p50
    %p52 = scmp.ne.s32.totalorder %s38, %s39
    %p53 = scmp.eq.s32.totalorder %s17, 1
    %p54 = por %p52, %p53
    %p56 = scmp.ne.s32.totalorder %s39, %s55
    %p57 = scmp.eq.s32.totalorder %s17, 0
    %p58 = por %p56, %p57
    %s60 = sadd.s32 %s59, 1
    %p63 = scmp.eq.s32.totalorder %s11, 1
    %p64 = scmp.ne.s32.totalorder %s59, %s61
    %p65 = scmp.eq.s32.totalorder %s11, 0
    %p66 = por %p64, %p65
    %p67 = scmp.ne.s32.totalorder %s59, %s61
    %p68 = scmp.eq.s32.totalorder %s16, 1
    %p69 = por %p67, %p68
    %p70 = scmp.ne.s32.totalorder %s61, %s62
    %p71 = scmp.eq.s32.totalorder %s16, 0
    %p72 = por %p70, %p71
    %p73 = scmp.ne.s32.totalorder %s61, %s62
    %p74 = scmp.eq.s32.totalorder %s17, 1
    %p75 = por %p73, %p74
    %p77 = scmp.ne.s32.totalorder %s62, %s76
    %p78 = scmp.eq.s32.totalorder %s17, 0
    %p79 = por %p77, %p78
    %s81 = sadd.s32 %s80, 1
    %p84 = scmp.eq.s32.totalorder %s11, 1
    %p85 = scmp.ne.s32.totalorder %s80, %s82
    %p86 = scmp.eq.s32.totalorder %s11, 0
    %p87 = por %p85, %p86
    %p88 = scmp.ne.s32.totalorder %s80, %s82
    %p89 = scmp.eq.s32.totalorder %s16, 1
    %p90 = por %p88, %p89
    %p91 = scmp.ne.s32.totalorder %s82, %s83
    %p92 = scmp.eq.s32.totalorder %s16, 0
    %p93 = por %p91, %p92
    %p94 = scmp.ne.s32.totalorder %s82, %s83
    %p95 = scmp.eq.s32.totalorder %s17, 1
    %p96 = por %p94, %p95
    %p98 = scmp.ne.s32.totalorder %s83, %s97
    %p99 = scmp.eq.s32.totalorder %s17, 0
    %p100 = por %p98, %p99
    %s102 = sadd.s32 %s101, 1
    %p105 = scmp.eq.s32.totalorder %s11, 1
    %p106 = scmp.ne.s32.totalorder %s101, %s103
    %p107 = scmp.eq.s32.totalorder %s11, 0
    %p108 = por %p106, %p107
    %p109 = scmp.ne.s32.totalorder %s101, %s103
    %p110 = scmp.eq.s32.totalorder %s16, 1
    %p111 = por %p109, %p110
    %p112 = scmp.ne.s32.totalorder %s103, %s104
    %p113 = scmp.eq.s32.totalorder %s16, 0
    %p114 = por %p112, %p113
    %p115 = scmp.ne.s32.totalorder %s103, %s104
    %p116 = scmp.eq.s32.totalorder %s17, 1
    %p117 = por %p115, %p116
    %p119 = scmp.ne.s32.totalorder %s104, %s118
    %p120 = scmp.eq.s32.totalorder %s17, 0
    %p121 = por %p119, %p120
    %s123 = sadd.s32 %s122, 1
    %p126 = scmp.eq.s32.totalorder %s11, 1
    %p127 = scmp.ne.s32.totalorder %s122, %s124
    %p128 = scmp.eq.s32.totalorder %s11, 0
    %p129 = por %p127, %p128
    %p130 = scmp.ne.s32.totalorder %s122, %s124
    %p131 = scmp.eq.s32.totalorder %s16, 1
    %p132 = por %p130, %p131
    %p133 = scmp.ne.s32.totalorder %s124, %s125
    %p134 = scmp.eq.s32.totalorder %s16, 0
    %p135 = por %p133, %p134
    %p136 = scmp.ne.s32.totalorder %s124, %s125
    %p137 = scmp.eq.s32.totalorder %s17, 1
    %p138 = por %p136, %p137
    %p140 = scmp.ne.s32.totalorder %s125, %s139
    %p141 = scmp.eq.s32.totalorder %s17, 0
    %p142 = por %p140, %p141
    %s143 = ssub.s32 %s18, %s30
    %s144 = ssub.s32 %s19, %s26
    %s145 = sor.u32 %s143, %s144
    %p146 = scmp.eq.s32.totalorder %s145, 0
    %s148 = sadd.s32 %s147, 1
    %s149 = scalar_select %p146, %s147, %s148
    %p152 = pneg %p146
    %p153 = scmp.eq.s32.totalorder %s11, 1
    %p154 = por %p152, %p153
    %p155 = scmp.ne.s32.totalorder %s147, %s150
    %p156 = scmp.eq.s32.totalorder %s11, 0
    %p157 = por %p155, %p156
    %p158 = scmp.ne.s32.totalorder %s147, %s150
    %p159 = scmp.eq.s32.totalorder %s16, 1
    %p160 = por %p158, %p159
    %p161 = scmp.ne.s32.totalorder %s150, %s151
    %p162 = scmp.eq.s32.totalorder %s16, 0
    %p163 = por %p161, %p162
    %p164 = scmp.ne.s32.totalorder %s150, %s151
    %p165 = scmp.eq.s32.totalorder %s17, 1
    %p166 = por %p164, %p165
    %p168 = scmp.ne.s32.totalorder %s151, %s167
    %p169 = scmp.eq.s32.totalorder %s17, 0
    %p170 = por %p168, %p169
    %p171 = scmp.le.s32.totalorder 1, %s11
    %p172 = scmp.lt.s32.totalorder %s11, 3
    %p173 = pnand %p171, %p172
    %p174 = pneg %p173
    // Predicated region
    $region9: #{spgen_forward.1} parent=5 // pred_check
      _
    $region10: #{spgen_forward.1} parent=5 // pred_check_branch
      %176 = sbr.rel (%p173) target = $region12
    $region11: #{spgen_forward.1} parent=5 // pred_region
      %s177 = ssub.s32 %s11, 1
      // Predicated region
      $region13: #{spgen_forward.1} parent=11 // pred_check
        %p178 = pneg %p72
      $region14: #{spgen_forward.1} parent=11 // pred_check_branch
        %180 = sbr.rel (%p178) target = $region16
      $region15: #{spgen_forward.1} parent=11 // pred_region
        _
      $region16: #{spgen_forward.1} parent=11 // pred_fallthru
        _
      // Predicated region
      $region17: #{spgen_forward.1} parent=11 // pred_check
        %p181 = pneg %p93
      $region18: #{spgen_forward.1} parent=11 // pred_check_branch
        %183 = sbr.rel (%p181) target = $region20
      $region19: #{spgen_forward.1} parent=11 // pred_region
        _
      $region20: #{spgen_forward.1} parent=11 // pred_fallthru
        _
      // Predicated region
      $region21: #{spgen_forward.1} parent=11 // pred_check
        %p184 = pneg %p114
      $region22: #{spgen_forward.1} parent=11 // pred_check_branch
        %186 = sbr.rel (%p184) target = $region24
      $region23: #{spgen_forward.1} parent=11 // pred_region
        _
      $region24: #{spgen_forward.1} parent=11 // pred_fallthru
        _
      // Predicated region
      $region25: #{spgen_forward.1} parent=11 // pred_check
        %p187 = pneg %p135
      $region26: #{spgen_forward.1} parent=11 // pred_check_branch
        %189 = sbr.rel (%p187) target = $region28
      $region27: #{spgen_forward.1} parent=11 // pred_region
        _
      $region28: #{spgen_forward.1} parent=11 // pred_fallthru
        _
    $region12: #{spgen_forward.1} parent=5 // pred_fallthru
      _
    %p190 = scmp.lt.s32.totalorder %s11, 2
    // Predicated region
    $region29: #{spgen_forward.1} parent=5 // pred_check
      %p191 = pneg %p190
    $region30: #{spgen_forward.1} parent=5 // pred_check_branch
      %193 = sbr.rel (%p191) target = $region32
    $region31: #{spgen_forward.1} parent=5 // pred_region
      // Predicated region
      $region33: #{spgen_forward.1} parent=31 // pred_check
        %p194 = pneg %p45
      $region34: #{spgen_forward.1} parent=31 // pred_check_branch
        %196 = sbr.rel (%p194) target = $region36
      $region35: #{spgen_forward.1} parent=31 // pred_region
        %s197 = smul.u32 2, %s19
        %p198 = scmp.lt.s32.totalorder %s18, 1
        %s199 = scalar_select %p198, %s18, 1
        %p200 = scmp.lt.s32.totalorder %s197, 1
        %s201 = scalar_select %p200, %s197, 1
        %s202 = smul.addr %s199, 64
        %s203 = sadd.s32 %s201, %s202
        %s204 = smul.addr %s203, 8
        %s205 = scalar_lea.vmem %s0, %s204
        %s206 = smul.u32 2, %s19
      $region36: #{spgen_forward.1} parent=31 // pred_fallthru
        _
    $region32: #{spgen_forward.1} parent=5 // pred_fallthru
      _
    %p207 = scmp.le.s32.totalorder 1, %s11
    %p208 = scmp.lt.s32.totalorder %s11, 3
    %p209 = pnand %p207, %p208
    %p210 = pneg %p209
    // Predicated region
    $region37: #{spgen_forward.1} parent=5 // pred_check
      _
    $region38: #{spgen_forward.1} parent=5 // pred_check_branch
      %212 = sbr.rel (%p209) target = $region40
    $region39: #{spgen_forward.1} parent=5 // pred_region
      %s213 = ssub.s32 %s11, 1
      %s214 = smul.u32 2, %s21
      %p215 = scmp.lt.s32.totalorder %s20, 1
      %s216 = scalar_select %p215, %s20, 1
      %p217 = scmp.lt.s32.totalorder %s214, 1
      %s218 = scalar_select %p217, %s214, 1
      %s219 = smul.addr %s216, 64
      %s220 = sadd.s32 %s218, %s219
      %s221 = smul.addr %s220, 8
      %s222 = scalar_lea.vmem %s0, %s221
      %p223 = pneg %p51
      %p224 = pneg %p48
      %p225 = pneg %p72
      %p226 = pneg %p69
      %p227 = pneg %p93
      %p228 = pneg %p90
      %p229 = pneg %p114
      %p230 = pneg %p111
      %p231 = pneg %p135
      %p232 = pneg %p132
      %p233 = pneg %p163
      %p234 = pneg %p160
      %s235 = smul.u32 2, %s21
      %p236 = scmp.lt.s32.totalorder %s20, 1
      %s237 = scalar_select %p236, %s20, 1
      %p238 = scmp.lt.s32.totalorder %s235, 1
      %s239 = scalar_select %p238, %s235, 1
      %s240 = smul.addr %s237, 2
      %s241 = sadd.s32 %s239, %s240
      %s242 = scalar_lea.vmem %s5, %s241
      %s243 = smul.u32 2, %s21
      %p244 = scmp.lt.s32.totalorder %s20, 1
      %s245 = scalar_select %p244, %s20, 1
      %p246 = scmp.lt.s32.totalorder %s243, 1
      %s247 = scalar_select %p246, %s243, 1
      %s248 = smul.addr %s245, 64
      %s249 = sadd.s32 %s247, %s248
      %s250 = smul.addr %s249, 8
      %s251 = scalar_lea.vmem %s0, %s250
      %s252 = smul.u32 2, %s21
      %s253 = smul.u32 2, %s21
      %p254 = scmp.lt.s32.totalorder %s20, 1
      %s255 = scalar_select %p254, %s20, 1
      %p256 = scmp.lt.s32.totalorder %s253, 1
      %s257 = scalar_select %p256, %s253, 1
      %s258 = smul.addr %s255, 2
      %s259 = sadd.s32 %s257, %s258
      %s260 = scalar_lea.vmem %s5, %s259
      %s261 = smul.u32 2, %s21
      %v262 = vld [vmem:[%s251] sm:$0xff]
      %v263 = vld [vmem:[%s251 + $0x8] sm:$0xff]
      %v264 = vld [vmem:[%s251 + $0x10] sm:$0xff]
      %v265 = vld [vmem:[%s251 + $0x18] sm:$0xff]
      %v266 = vld [vmem:[%s251 + $0x20] sm:$0xff]
      %v267 = vld [vmem:[%s251 + $0x28] sm:$0xff]
      %v268 = vld [vmem:[%s251 + $0x30] sm:$0xff]
      %v269 = vld [vmem:[%s251 + $0x38] sm:$0xff]
      %v270 = vld [vmem:[%s251 + $0x40] sm:$0xff]
      %v271 = vld [vmem:[%s251 + $0x48] sm:$0xff]
      %v272 = vld [vmem:[%s251 + $0x50] sm:$0xff]
      %v273 = vld [vmem:[%s251 + $0x58] sm:$0xff]
      %v274 = vld [vmem:[%s251 + $0x60] sm:$0xff]
      %v275 = vld [vmem:[%s251 + $0x68] sm:$0xff]
      %v276 = vld [vmem:[%s251 + $0x70] sm:$0xff]
      %v277 = vld [vmem:[%s251 + $0x78] sm:$0xff]
      %v278 = vld [vmem:[%s251 + $0x80] sm:$0xff]
      %v279 = vld [vmem:[%s251 + $0x88] sm:$0xff]
      %v280 = vld [vmem:[%s251 + $0x90] sm:$0xff]
      %v281 = vld [vmem:[%s251 + $0x98] sm:$0xff]
      %v282 = vld [vmem:[%s251 + $0xa0] sm:$0xff]
      %v283 = vld [vmem:[%s251 + $0xa8] sm:$0xff]
      %v284 = vld [vmem:[%s251 + $0xb0] sm:$0xff]
      %v285 = vld [vmem:[%s251 + $0xb8] sm:$0xff]
      %v286 = vld [vmem:[%s251 + $0xc0] sm:$0xff]
      %v287 = vld [vmem:[%s251 + $0xc8] sm:$0xff]
      %v288 = vld [vmem:[%s251 + $0xd0] sm:$0xff]
      %v289 = vld [vmem:[%s251 + $0xd8] sm:$0xff]
      %v290 = vld [vmem:[%s251 + $0xe0] sm:$0xff]
      %v291 = vld [vmem:[%s251 + $0xe8] sm:$0xff]
      %v292 = vld [vmem:[%s251 + $0xf0] sm:$0xff]
      %v293 = vld [vmem:[%s251 + $0xf8] sm:$0xff]
      %v294 = vld [vmem:[%s251 + $0x100] sm:$0xff]
      %v295 = vld [vmem:[%s251 + $0x108] sm:$0xff]
      %v296 = vld [vmem:[%s251 + $0x110] sm:$0xff]
      %v297 = vld [vmem:[%s251 + $0x118] sm:$0xff]
      %v298 = vld [vmem:[%s251 + $0x120] sm:$0xff]
      %v299 = vld [vmem:[%s251 + $0x128] sm:$0xff]
      %v300 = vld [vmem:[%s251 + $0x130] sm:$0xff]
      %v301 = vld [vmem:[%s251 + $0x138] sm:$0xff]
      %v302 = vld [vmem:[%s251 + $0x140] sm:$0xff]
      %v303 = vld [vmem:[%s251 + $0x148] sm:$0xff]
      %v304 = vld [vmem:[%s251 + $0x150] sm:$0xff]
      %v305 = vld [vmem:[%s251 + $0x158] sm:$0xff]
      %v306 = vld [vmem:[%s251 + $0x160] sm:$0xff]
      %v307 = vld [vmem:[%s251 + $0x168] sm:$0xff]
      %v308 = vld [vmem:[%s251 + $0x170] sm:$0xff]
      %v309 = vld [vmem:[%s251 + $0x178] sm:$0xff]
      %v310 = vld [vmem:[%s251 + $0x180] sm:$0xff]
      %v311 = vld [vmem:[%s251 + $0x188] sm:$0xff]
      %v312 = vld [vmem:[%s251 + $0x190] sm:$0xff]
      %v313 = vld [vmem:[%s251 + $0x198] sm:$0xff]
      %v314 = vld [vmem:[%s251 + $0x1a0] sm:$0xff]
      %v315 = vld [vmem:[%s251 + $0x1a8] sm:$0xff]
      %v316 = vld [vmem:[%s251 + $0x1b0] sm:$0xff]
      %v317 = vld [vmem:[%s251 + $0x1b8] sm:$0xff]
      %v318 = vld [vmem:[%s251 + $0x1c0] sm:$0xff]
      %v319 = vld [vmem:[%s251 + $0x1c8] sm:$0xff]
      %v320 = vld [vmem:[%s251 + $0x1d0] sm:$0xff]
      %v321 = vld [vmem:[%s251 + $0x1d8] sm:$0xff]
      %v322 = vld [vmem:[%s251 + $0x1e0] sm:$0xff]
      %v323 = vld [vmem:[%s251 + $0x1e8] sm:$0xff]
      %v324 = vld [vmem:[%s251 + $0x1f0] sm:$0xff]
      %v325 = vld [vmem:[%s251 + $0x1f8] sm:$0xff]
      %v326 = vld [vmem:[%s2] sm:$0xff]
      %v327 = vld [vmem:[%s2 + $0x8] sm:$0xff]
      %v328 = vld [vmem:[%s2 + $0x10] sm:$0xff]
      %v329 = vld [vmem:[%s2 + $0x18] sm:$0xff]
      %v330 = vld [vmem:[%s2 + $0x20] sm:$0xff]
      %v331 = vld [vmem:[%s2 + $0x28] sm:$0xff]
      %v332 = vld [vmem:[%s2 + $0x30] sm:$0xff]
      %v333 = vld [vmem:[%s2 + $0x38] sm:$0xff]
      %v334 = vld [vmem:[%s1] sm:$0xff]
      %v335 = vld [vmem:[%s1 + $0x8] sm:$0xff]
      %v336 = vld [vmem:[%s1 + $0x10] sm:$0xff]
      %v337 = vld [vmem:[%s1 + $0x18] sm:$0xff]
      %v338 = vld [vmem:[%s1 + $0x20] sm:$0xff]
      %v339 = vld [vmem:[%s1 + $0x28] sm:$0xff]
      %v340 = vld [vmem:[%s1 + $0x30] sm:$0xff]
      %v341 = vld [vmem:[%s1 + $0x38] sm:$0xff]
      %v342 = vld [vmem:[%s1 + $0x40] sm:$0xff]
      %v343 = vld [vmem:[%s1 + $0x48] sm:$0xff]
      %v344 = vld [vmem:[%s1 + $0x50] sm:$0xff]
      %v345 = vld [vmem:[%s1 + $0x58] sm:$0xff]
      %v346 = vld [vmem:[%s1 + $0x60] sm:$0xff]
      %v347 = vld [vmem:[%s1 + $0x68] sm:$0xff]
      %v348 = vld [vmem:[%s1 + $0x70] sm:$0xff]
      %v349 = vld [vmem:[%s1 + $0x78] sm:$0xff]
      %351 = vset.pattern.permute.xlu0 0
      %352 = vperm.xlu0 %351, %v326
      %v353 = vpop.permute.xlu0 %352
      %356 = vset.pattern.permute.xlu0 0
      %357 = vperm.xlu0 %356, %v327
      %v358 = vpop.permute.xlu0 %357
      %361 = vset.pattern.permute.xlu0 0
      %362 = vperm.xlu0 %361, %v328
      %v363 = vpop.permute.xlu0 %362
      %366 = vset.pattern.permute.xlu0 0
      %367 = vperm.xlu0 %366, %v329
      %v368 = vpop.permute.xlu0 %367
      %371 = vset.pattern.permute.xlu0 0
      %372 = vperm.xlu0 %371, %v330
      %v373 = vpop.permute.xlu0 %372
      %376 = vset.pattern.permute.xlu0 0
      %377 = vperm.xlu0 %376, %v331
      %v378 = vpop.permute.xlu0 %377
      %381 = vset.pattern.permute.xlu0 0
      %382 = vperm.xlu0 %381, %v332
      %v383 = vpop.permute.xlu0 %382
      %386 = vset.pattern.permute.xlu0 0
      %387 = vperm.xlu0 %386, %v333
      %v388 = vpop.permute.xlu0 %387
      %390 = vmatprep.subr.mxu0 %v293
      %391 = vmatpush1.msra.mxu0 %v292
      %392 = vmatprep.subr.mxu0 %v291
      %393 = vmatpush1.msra.mxu0 %v290
      %394 = vmatprep.subr.mxu0 %v289
      %395 = vmatpush1.msra.mxu0 %v288
      %396 = vmatprep.subr.mxu0 %v287
      %397 = vmatpush1.msra.mxu0 %v286
      %398 = vmatprep.subr.mxu0 %v285
      %399 = vmatpush1.msra.mxu0 %v284
      %400 = vmatprep.subr.mxu0 %v283
      %401 = vmatpush1.msra.mxu0 %v282
      %402 = vmatprep.subr.mxu0 %v281
      %403 = vmatpush1.msra.mxu0 %v280
      %404 = vmatprep.subr.mxu0 %v279
      %405 = vmatpush1.msra.mxu0 %v278
      %406 = vmatprep.subr.mxu0 %v277
      %407 = vmatpush1.msra.mxu0 %v276
      %408 = vmatprep.subr.mxu0 %v275
      %409 = vmatpush1.msra.mxu0 %v274
      %410 = vmatprep.subr.mxu0 %v273
      %411 = vmatpush1.msra.mxu0 %v272
      %412 = vmatprep.subr.mxu0 %v271
      %413 = vmatpush1.msra.mxu0 %v270
      %414 = vmatprep.subr.mxu0 %v269
      %415 = vmatpush1.msra.mxu0 %v268
      %416 = vmatprep.subr.mxu0 %v267
      %417 = vmatpush1.msra.mxu0 %v266
      %418 = vmatprep.subr.mxu0 %v265
      %419 = vmatpush1.msra.mxu0 %v264
      %420 = vmatprep.subr.mxu0 %v263
      %421 = vmatpush1.msra.mxu0 %v262
      %422 = vmatprep.subr.mxu0 %v325
      %423 = vmatpush2.msra.mxu0 %v324
      %424 = vmatprep.subr.mxu0 %v323
      %425 = vmatpush2.msra.mxu0 %v322
      %426 = vmatprep.subr.mxu0 %v321
      %427 = vmatpush2.msra.mxu0 %v320
      %428 = vmatprep.subr.mxu0 %v319
      %429 = vmatpush2.msra.mxu0 %v318
      %430 = vmatprep.subr.mxu0 %v317
      %431 = vmatpush2.msra.mxu0 %v316
      %432 = vmatprep.subr.mxu0 %v315
      %433 = vmatpush2.msra.mxu0 %v314
      %434 = vmatprep.subr.mxu0 %v313
      %435 = vmatpush2.msra.mxu0 %v312
      %436 = vmatprep.subr.mxu0 %v311
      %437 = vmatpush2.msra.mxu0 %v310
      %438 = vmatprep.subr.mxu0 %v309
      %439 = vmatpush2.msra.mxu0 %v308
      %440 = vmatprep.subr.mxu0 %v307
      %441 = vmatpush2.msra.mxu0 %v306
      %442 = vmatprep.subr.mxu0 %v305
      %443 = vmatpush2.msra.mxu0 %v304
      %444 = vmatprep.subr.mxu0 %v303
      %445 = vmatpush2.msra.mxu0 %v302
      %446 = vmatprep.subr.mxu0 %v301
      %447 = vmatpush2.msra.mxu0 %v300
      %448 = vmatprep.subr.mxu0 %v299
      %449 = vmatpush2.msra.mxu0 %v298
      %450 = vmatprep.subr.mxu0 %v297
      %451 = vmatpush2.msra.mxu0 %v296
      %452 = vmatprep.subr.mxu0 %v295
      %453 = vmatpush2.msra.mxu0 %v294
      %454 = vmatprep.mubr.f32.mxu0 %v335
      %455 = vmatmul.mubr.f32.gmra.mxu0 %v334
      %v456 = vpop.f32.mrf.mxu0
      %v457 = vadd.f32 %v353, %v456
      %v458 = vpop.f32.mrf.mxu0
      %v459 = vadd.f32 %v353, %v458
      %460 = vmatprep.mubr.f32.mxu0 %v337
      %461 = vmatmul.mubr.f32.gmra.mxu0 %v336
      %v462 = vpop.f32.mrf.mxu0
      %v463 = vadd.f32 %v358, %v462
      %v464 = vpop.f32.mrf.mxu0
      %v465 = vadd.f32 %v358, %v464
      %466 = vmatprep.mubr.f32.mxu0 %v339
      %467 = vmatmul.mubr.f32.gmra.mxu0 %v338
      %v468 = vpop.f32.mrf.mxu0
      %v469 = vadd.f32 %v363, %v468
      %v470 = vpop.f32.mrf.mxu0
      %v471 = vadd.f32 %v363, %v470
      %472 = vmatprep.mubr.f32.mxu0 %v341
      %473 = vmatmul.mubr.f32.gmra.mxu0 %v340
      %v474 = vpop.f32.mrf.mxu0
      %v475 = vadd.f32 %v368, %v474
      %v476 = vpop.f32.mrf.mxu0
      %v477 = vadd.f32 %v368, %v476
      %478 = vmatprep.mubr.f32.mxu0 %v343
      %479 = vmatmul.mubr.f32.gmra.mxu0 %v342
      %v480 = vpop.f32.mrf.mxu0
      %v481 = vadd.f32 %v373, %v480
      %v482 = vpop.f32.mrf.mxu0
      %v483 = vadd.f32 %v373, %v482
      %484 = vmatprep.mubr.f32.mxu0 %v345
      %485 = vmatmul.mubr.f32.gmra.mxu0 %v344
      %v486 = vpop.f32.mrf.mxu0
      %v487 = vadd.f32 %v378, %v486
      %v488 = vpop.f32.mrf.mxu0
      %v489 = vadd.f32 %v378, %v488
      %490 = vmatprep.mubr.f32.mxu0 %v347
      %491 = vmatmul.mubr.f32.gmra.mxu0 %v346
      %v492 = vpop.f32.mrf.mxu0
      %v493 = vadd.f32 %v383, %v492
      %v494 = vpop.f32.mrf.mxu0
      %v495 = vadd.f32 %v383, %v494
      %496 = vmatprep.mubr.f32.mxu0 %v349
      %497 = vmatmul.mubr.f32.gmra.mxu0 %v348
      %v498 = vpop.f32.mrf.mxu0
      %v499 = vadd.f32 %v388, %v498
      %v500 = vpop.f32.mrf.mxu0
      %v501 = vadd.f32 %v388, %v500
      %502 = vdwg.mxu0
      %v503 = vmul.f32 %v457, %v457
      %v504 = vmul.f32 %v459, %v459
      %v505 = vmul.f32 %v463, %v463
      %v506 = vmul.f32 %v465, %v465
      %v507 = vmul.f32 %v469, %v469
      %v508 = vmul.f32 %v471, %v471
      %v509 = vmul.f32 %v475, %v475
      %v510 = vmul.f32 %v477, %v477
      %v511 = vmul.f32 %v481, %v481
      %v512 = vmul.f32 %v483, %v483
      %v513 = vmul.f32 %v487, %v487
      %v514 = vmul.f32 %v489, %v489
      %v515 = vmul.f32 %v493, %v493
      %v516 = vmul.f32 %v495, %v495
      %v517 = vmul.f32 %v499, %v499
      %v518 = vmul.f32 %v501, %v501
      %v519 = vadd.f32 %v503, %v505
      %v520 = vadd.f32 %v519, %v507
      %v521 = vadd.f32 %v520, %v509
      %v522 = vadd.f32 %v521, %v511
      %v523 = vadd.f32 %v522, %v513
      %v524 = vadd.f32 %v523, %v515
      %v525 = vadd.f32 %v524, %v517
      %v526 = vrot.slane %v525, 4
      %v527 = vadd.f32 %v525, %v526
      %v528 = vrot.slane %v527, 2
      %v529 = vadd.f32 %v527, %v528
      %v530 = vrot.slane %v529, 1
      %v531 = vadd.f32 %v529, %v530
      %v532 = vadd.f32 %v504, %v506
      %v533 = vadd.f32 %v532, %v508
      %v534 = vadd.f32 %v533, %v510
      %v535 = vadd.f32 %v534, %v512
      %v536 = vadd.f32 %v535, %v514
      %v537 = vadd.f32 %v536, %v516
      %v538 = vadd.f32 %v537, %v518
      %v539 = vrot.slane %v538, 4
      %v540 = vadd.f32 %v538, %v539
      %v541 = vrot.slane %v540, 2
      %v542 = vadd.f32 %v540, %v541
      %v543 = vrot.slane %v542, 1
      %v544 = vadd.f32 %v542, %v543
      %v545 = vrcp.pop 64.0
      %v546 = vmul.f32 %v531, %v545
      %v547 = vmul.f32 %v544, %v545
      %v548 = vadd.f32 %v546, 1e-06
      %v549 = vadd.f32 %v547, 1e-06
      %v550 = vrsqrt.pop %v548
      %v551 = vrsqrt.pop %v549
      %v552 = vmul.f32 %v457, %v550
      %v553 = vmul.f32 %v459, %v551
      %v554 = vmul.f32 %v463, %v550
      %v555 = vmul.f32 %v465, %v551
      %v556 = vmul.f32 %v469, %v550
      %v557 = vmul.f32 %v471, %v551
      %v558 = vmul.f32 %v475, %v550
      %v559 = vmul.f32 %v477, %v551
      %v560 = vmul.f32 %v481, %v550
      %v561 = vmul.f32 %v483, %v551
      %v562 = vmul.f32 %v487, %v550
      %v563 = vmul.f32 %v489, %v551
      %v564 = vmul.f32 %v493, %v550
      %v565 = vmul.f32 %v495, %v551
      %v566 = vmul.f32 %v499, %v550
      %v567 = vmul.f32 %v501, %v551
      %568 = vset.pattern.permute.xlu0 1
      %569 = vperm.xlu0 %568, %v326
      %v570 = vpop.permute.xlu0 %569
      %572 = vset.pattern.permute.xlu0 1
      %573 = vperm.xlu0 %572, %v327
      %v574 = vpop.permute.xlu0 %573
      %576 = vset.pattern.permute.xlu0 1
      %577 = vperm.xlu0 %576, %v328
      %v578 = vpop.permute.xlu0 %577
      %580 = vset.pattern.permute.xlu0 1
      %581 = vperm.xlu0 %580, %v329
      %v582 = vpop.permute.xlu0 %581
      %584 = vset.pattern.permute.xlu0 1
      %585 = vperm.xlu0 %584, %v330
      %v586 = vpop.permute.xlu0 %585
      %588 = vset.pattern.permute.xlu0 1
      %589 = vperm.xlu0 %588, %v331
      %v590 = vpop.permute.xlu0 %589
      %592 = vset.pattern.permute.xlu0 1
      %593 = vperm.xlu0 %592, %v332
      %v594 = vpop.permute.xlu0 %593
      %596 = vset.pattern.permute.xlu0 1
      %597 = vperm.xlu0 %596, %v333
      %v598 = vpop.permute.xlu0 %597
      %v600 = vmul.f32 %v552, %v570
      %v601 = vmul.f32 %v553, %v570
      %v602 = vmul.f32 %v554, %v574
      %v603 = vmul.f32 %v555, %v574
      %v604 = vmul.f32 %v556, %v578
      %v605 = vmul.f32 %v557, %v578
      %v606 = vmul.f32 %v558, %v582
      %v607 = vmul.f32 %v559, %v582
      %v608 = vmul.f32 %v560, %v586
      %v609 = vmul.f32 %v561, %v586
      %v610 = vmul.f32 %v562, %v590
      %v611 = vmul.f32 %v563, %v590
      %v612 = vmul.f32 %v564, %v594
      %v613 = vmul.f32 %v565, %v594
      %v614 = vmul.f32 %v566, %v598
      %v615 = vmul.f32 %v567, %v598
      %616 = vset.pattern.permute.xlu0 2
      %617 = vperm.xlu0 %616, %v326
      %v618 = vpop.permute.xlu0 %617
      %620 = vset.pattern.permute.xlu0 2
      %621 = vperm.xlu0 %620, %v327
      %v622 = vpop.permute.xlu0 %621
      %624 = vset.pattern.permute.xlu0 2
      %625 = vperm.xlu0 %624, %v328
      %v626 = vpop.permute.xlu0 %625
      %628 = vset.pattern.permute.xlu0 2
      %629 = vperm.xlu0 %628, %v329
      %v630 = vpop.permute.xlu0 %629
      %632 = vset.pattern.permute.xlu0 2
      %633 = vperm.xlu0 %632, %v330
      %v634 = vpop.permute.xlu0 %633
      %636 = vset.pattern.permute.xlu0 2
      %637 = vperm.xlu0 %636, %v331
      %v638 = vpop.permute.xlu0 %637
      %640 = vset.pattern.permute.xlu0 2
      %641 = vperm.xlu0 %640, %v332
      %v642 = vpop.permute.xlu0 %641
      %644 = vset.pattern.permute.xlu0 2
      %645 = vperm.xlu0 %644, %v333
      %v646 = vpop.permute.xlu0 %645
      %v648 = vadd.f32 %v600, %v618
      %v649 = vadd.f32 %v601, %v618
      %v650 = vadd.f32 %v602, %v622
      %v651 = vadd.f32 %v603, %v622
      %v652 = vadd.f32 %v604, %v626
      %v653 = vadd.f32 %v605, %v626
      %v654 = vadd.f32 %v606, %v630
      %v655 = vadd.f32 %v607, %v630
      %v656 = vadd.f32 %v608, %v634
      %v657 = vadd.f32 %v609, %v634
      %v658 = vadd.f32 %v610, %v638
      %v659 = vadd.f32 %v611, %v638
      %v660 = vadd.f32 %v612, %v642
      %v661 = vadd.f32 %v613, %v642
      %v662 = vadd.f32 %v614, %v646
      %v663 = vadd.f32 %v615, %v646
      %v664 = vmul.f32 %v648, 0.5
      %v665 = vmul.f32 %v649, 0.5
      %v666 = vmul.f32 %v650, 0.5
      %v667 = vmul.f32 %v651, 0.5
      %v668 = vmul.f32 %v652, 0.5
      %v669 = vmul.f32 %v653, 0.5
      %v670 = vmul.f32 %v654, 0.5
      %v671 = vmul.f32 %v655, 0.5
      %v672 = vmul.f32 %v656, 0.5
      %v673 = vmul.f32 %v657, 0.5
      %v674 = vmul.f32 %v658, 0.5
      %v675 = vmul.f32 %v659, 0.5
      %v676 = vmul.f32 %v660, 0.5
      %v677 = vmul.f32 %v661, 0.5
      %v678 = vmul.f32 %v662, 0.5
      %v679 = vmul.f32 %v663, 0.5
      %v680 = vmul.f32 %v648, 0.70710677
      %v681 = vmul.f32 %v649, 0.70710677
      %v682 = vmul.f32 %v650, 0.70710677
      %v683 = vmul.f32 %v651, 0.70710677
      %v684 = vmul.f32 %v652, 0.70710677
      %v685 = vmul.f32 %v653, 0.70710677
      %v686 = vmul.f32 %v654, 0.70710677
      %v687 = vmul.f32 %v655, 0.70710677
      %v688 = vmul.f32 %v656, 0.70710677
      %v689 = vmul.f32 %v657, 0.70710677
      %v690 = vmul.f32 %v658, 0.70710677
      %v691 = vmul.f32 %v659, 0.70710677
      %v692 = vmul.f32 %v660, 0.70710677
      %v693 = vmul.f32 %v661, 0.70710677
      %v694 = vmul.f32 %v662, 0.70710677
      %v695 = vmul.f32 %v663, 0.70710677
      %v696 = verf.f32.pop %v680
      %v697 = verf.f32.pop %v681
      %v698 = verf.f32.pop %v682
      %v699 = verf.f32.pop %v683
      %v700 = verf.f32.pop %v684
      %v701 = verf.f32.pop %v685
      %v702 = verf.f32.pop %v686
      %v703 = verf.f32.pop %v687
      %v704 = verf.f32.pop %v688
      %v705 = verf.f32.pop %v689
      %v706 = verf.f32.pop %v690
      %v707 = verf.f32.pop %v691
      %v708 = verf.f32.pop %v692
      %v709 = verf.f32.pop %v693
      %v710 = verf.f32.pop %v694
      %v711 = verf.f32.pop %v695
      %v712 = vadd.f32 %v696, 1.0
      %v713 = vadd.f32 %v697, 1.0
      %v714 = vadd.f32 %v698, 1.0
      %v715 = vadd.f32 %v699, 1.0
      %v716 = vadd.f32 %v700, 1.0
      %v717 = vadd.f32 %v701, 1.0
      %v718 = vadd.f32 %v702, 1.0
      %v719 = vadd.f32 %v703, 1.0
      %v720 = vadd.f32 %v704, 1.0
      %v721 = vadd.f32 %v705, 1.0
      %v722 = vadd.f32 %v706, 1.0
      %v723 = vadd.f32 %v707, 1.0
      %v724 = vadd.f32 %v708, 1.0
      %v725 = vadd.f32 %v709, 1.0
      %v726 = vadd.f32 %v710, 1.0
      %v727 = vadd.f32 %v711, 1.0
      %v728 = vmul.f32 %v664, %v712
      %v729 = vmul.f32 %v665, %v713
      %v730 = vmul.f32 %v666, %v714
      %v731 = vmul.f32 %v667, %v715
      %v732 = vmul.f32 %v668, %v716
      %v733 = vmul.f32 %v669, %v717
      %v734 = vmul.f32 %v670, %v718
      %v735 = vmul.f32 %v671, %v719
      %v736 = vmul.f32 %v672, %v720
      %v737 = vmul.f32 %v673, %v721
      %v738 = vmul.f32 %v674, %v722
      %v739 = vmul.f32 %v675, %v723
      %v740 = vmul.f32 %v676, %v724
      %v741 = vmul.f32 %v677, %v725
      %v742 = vmul.f32 %v678, %v726
      %v743 = vmul.f32 %v679, %v727
      %v744 = vld [vmem:[%s4] sm:$0xff]
      %v745 = vld [vmem:[%s4 + $0x8] sm:$0xff]
      %v746 = vld [vmem:[%s3] sm:$0xff]
      %v747 = vld [vmem:[%s3 + $0x8] sm:$0xff]
      %749 = vset.pattern.permute.xlu0 0
      %750 = vperm.xlu0 %749, %v744
      %v751 = vpop.permute.xlu0 %750
      %754 = vset.pattern.permute.xlu0 0
      %755 = vperm.xlu0 %754, %v745
      %v756 = vpop.permute.xlu0 %755
      %vm758 = vcmask 523264
      %v760 = vsel %vm758, %v746, 0
      %v763 = vsel %vm758, %v747, 0
      %765 = vmatprep.subr.mxu0 0.0
      %766 = vmatpush1.msra.mxu0 0.0
      %767 = vmatprep.subr.mxu0 0.0
      %768 = vmatpush1.msra.mxu0 0.0
      %769 = vmatprep.subr.mxu0 0.0
      %770 = vmatpush1.msra.mxu0 0.0
      %771 = vmatprep.subr.mxu0 0.0
      %772 = vmatpush1.msra.mxu0 0.0
      %773 = vmatprep.subr.mxu0 0.0
      %774 = vmatpush1.msra.mxu0 0.0
      %775 = vmatprep.subr.mxu0 0.0
      %776 = vmatpush1.msra.mxu0 0.0
      %777 = vmatprep.subr.mxu0 0.0
      %778 = vmatpush1.msra.mxu0 0.0
      %779 = vmatprep.subr.mxu0 0.0
      %780 = vmatpush1.msra.mxu0 0.0
      %781 = vmatprep.subr.mxu0 %v743
      %782 = vmatpush1.msra.mxu0 %v742
      %783 = vmatprep.subr.mxu0 %v741
      %784 = vmatpush1.msra.mxu0 %v740
      %785 = vmatprep.subr.mxu0 %v739
      %786 = vmatpush1.msra.mxu0 %v738
      %787 = vmatprep.subr.mxu0 %v737
      %788 = vmatpush1.msra.mxu0 %v736
      %789 = vmatprep.subr.mxu0 %v735
      %790 = vmatpush1.msra.mxu0 %v734
      %791 = vmatprep.subr.mxu0 %v733
      %792 = vmatpush1.msra.mxu0 %v732
      %793 = vmatprep.subr.mxu0 %v731
      %794 = vmatpush1.msra.mxu0 %v730
      %795 = vmatprep.subr.mxu0 %v729
      %796 = vmatpush1.msra.mxu0 %v728
      %797 = vmatprep.subr.mxu0 0.0
      %798 = vmatpush2.msra.mxu0 0.0
      %799 = vmatprep.subr.mxu0 0.0
      %800 = vmatpush2.msra.mxu0 0.0
      %801 = vmatprep.subr.mxu0 0.0
      %802 = vmatpush2.msra.mxu0 0.0
      %803 = vmatprep.subr.mxu0 0.0
      %804 = vmatpush2.msra.mxu0 0.0
      %805 = vmatprep.subr.mxu0 0.0
      %806 = vmatpush2.msra.mxu0 0.0
      %807 = vmatprep.subr.mxu0 0.0
      %808 = vmatpush2.msra.mxu0 0.0
      %809 = vmatprep.subr.mxu0 0.0
      %810 = vmatpush2.msra.mxu0 0.0
      %811 = vmatprep.subr.mxu0 0.0
      %812 = vmatpush2.msra.mxu0 0.0
      %813 = vmatprep.subr.mxu0 0.0
      %814 = vmatpush2.msra.mxu0 0.0
      %815 = vmatprep.subr.mxu0 0.0
      %816 = vmatpush2.msra.mxu0 0.0
      %817 = vmatprep.subr.mxu0 0.0
      %818 = vmatpush2.msra.mxu0 0.0
      %819 = vmatprep.subr.mxu0 0.0
      %820 = vmatpush2.msra.mxu0 0.0
      %821 = vmatprep.subr.mxu0 0.0
      %822 = vmatpush2.msra.mxu0 0.0
      %823 = vmatprep.subr.mxu0 0.0
      %824 = vmatpush2.msra.mxu0 0.0
      %825 = vmatprep.subr.mxu0 0.0
      %826 = vmatpush2.msra.mxu0 0.0
      %827 = vmatprep.subr.mxu0 0.0
      %828 = vmatpush2.msra.mxu0 0.0
      %829 = vmatprep.mubr.f32.mxu0 0.0
      %830 = vmatmul.mubr.f32.gmra.mxu0 %v760
      %v831 = vpop.f32.mrf.mxu0
      %v832 = vadd.f32 %v751, %v831
      %v833 = vpop.f32.mrf.mxu0
      %v834 = vadd.f32 %v751, %v833
      %835 = vmatprep.mubr.f32.mxu0 0.0
      %836 = vmatmul.mubr.f32.gmra.mxu0 %v763
      %v837 = vpop.f32.mrf.mxu0
      %v838 = vadd.f32 %v756, %v837
      %v839 = vpop.f32.mrf.mxu0
      %v840 = vadd.f32 %v756, %v839
      %841 = vdwg.mxu0
      %v842 = vmul.f32 %v832, %v832
      %v843 = vmul.f32 %v834, %v834
      %v844 = vmul.f32 %v838, %v838
      %v845 = vmul.f32 %v840, %v840
      %v846 = vadd.f32 %v842, %v844
      %v847 = vrot.slane %v846, 4
      %v848 = vadd.f32 %v846, %v847
      %v849 = vrot.slane %v848, 2
      %v850 = vadd.f32 %v848, %v849
      %v851 = vrot.slane %v850, 1
      %v852 = vadd.f32 %v850, %v851
      %v853 = vadd.f32 %v843, %v845
      %v854 = vrot.slane %v853, 4
      %v855 = vadd.f32 %v853, %v854
      %v856 = vrot.slane %v855, 2
      %v857 = vadd.f32 %v855, %v856
      %v858 = vrot.slane %v857, 1
      %v859 = vadd.f32 %v857, %v858
      %v860 = vrcp.pop 16.0
      %v861 = vmul.f32 %v852, %v860
      %v862 = vmul.f32 %v859, %v860
      %v863 = vadd.f32 %v861, 1e-06
      %v864 = vadd.f32 %v862, 1e-06
      %v865 = vrsqrt.pop %v863
      %v866 = vrsqrt.pop %v864
      %v867 = vmul.f32 %v832, %v865
      %v868 = vmul.f32 %v834, %v866
      %v869 = vmul.f32 %v838, %v865
      %v870 = vmul.f32 %v840, %v866
      %871 = vset.pattern.permute.xlu0 1
      %872 = vperm.xlu0 %871, %v744
      %v873 = vpop.permute.xlu0 %872
      %875 = vset.pattern.permute.xlu0 1
      %876 = vperm.xlu0 %875, %v745
      %v877 = vpop.permute.xlu0 %876
      %v879 = vmul.f32 %v867, %v873
      %v880 = vmul.f32 %v868, %v873
      %v881 = vmul.f32 %v869, %v877
      %v882 = vmul.f32 %v870, %v877
      %883 = vset.pattern.permute.xlu0 2
      %884 = vperm.xlu0 %883, %v744
      %v885 = vpop.permute.xlu0 %884
      %887 = vset.pattern.permute.xlu0 2
      %888 = vperm.xlu0 %887, %v745
      %v889 = vpop.permute.xlu0 %888
      %v891 = vadd.f32 %v879, %v885
      %v892 = vadd.f32 %v880, %v885
      %v893 = vadd.f32 %v881, %v889
      %v894 = vadd.f32 %v882, %v889
      %v895 = vmul.f32 %v891, 0.5
      %v896 = vmul.f32 %v892, 0.5
      %v897 = vmul.f32 %v893, 0.5
      %v898 = vmul.f32 %v894, 0.5
      %v899 = vmul.f32 %v891, 0.70710677
      %v900 = vmul.f32 %v892, 0.70710677
      %v901 = vmul.f32 %v893, 0.70710677
      %v902 = vmul.f32 %v894, 0.70710677
      %v903 = verf.f32.pop %v899
      %v904 = verf.f32.pop %v900
      %v905 = verf.f32.pop %v901
      %v906 = verf.f32.pop %v902
      %v907 = vadd.f32 %v903, 1.0
      %v908 = vadd.f32 %v904, 1.0
      %v909 = vadd.f32 %v905, 1.0
      %v910 = vadd.f32 %v906, 1.0
      %v911 = vmul.f32 %v895, %v907
      %v912 = vmul.f32 %v896, %v908
      %v913 = vmul.f32 %v897, %v909
      %v914 = vmul.f32 %v898, %v910
      %915 = vset.pattern.permute.xlu0 3
      %916 = vperm.xlu0 %915, %v744
      %v917 = vpop.permute.xlu0 %916
      %919 = vset.pattern.permute.xlu0 3
      %920 = vperm.xlu0 %919, %v745
      %v921 = vpop.permute.xlu0 %920
      %v923 = vmul.f32 %v911, %v917
      %v924 = vmul.f32 %v912, %v917
      %v925 = vmul.f32 %v913, %v921
      %v926 = vmul.f32 %v914, %v921
      %v927 = vadd.f32 %v923, %v925
      %v928 = vrot.slane %v927, 4
      %v929 = vadd.f32 %v927, %v928
      %v930 = vrot.slane %v929, 2
      %v931 = vadd.f32 %v929, %v930
      %v932 = vrot.slane %v931, 1
      %v933 = vadd.f32 %v931, %v932
      %v934 = vadd.f32 %v924, %v926
      %v935 = vrot.slane %v934, 4
      %v936 = vadd.f32 %v934, %v935
      %v937 = vrot.slane %v936, 2
      %v938 = vadd.f32 %v936, %v937
      %v939 = vrot.slane %v938, 1
      %v940 = vadd.f32 %v938, %v939
      %941 = vset.pattern.permute.xlu0 4
      %942 = vperm.xlu0 %941, %v744
      %v943 = vpop.permute.xlu0 %942
      %v945 = vadd.f32 %v933, %v943
      %v946 = vadd.f32 %v940, %v943
      %v949 = vcombine.low %v945, %v946
      %v951 = vunpack.c.l.s4 1966171168
      %v952 = vunpack.c.0.s8 %v951
      %v953 = vlaneseq
      %v954 = vshrl.u32 %v953, 7
      %v955 = vsub.s32 %v952, %v954
      %v956 = vrot.slane %v949, %v955
      %v958 = vunpack.c.l.s4 1966171168
      %v959 = vunpack.c.0.s8 %v958
      %v960 = vlaneseq
      %v961 = vshrl.u32 %v960, 7
      %v962 = vsub.s32 %v959, %v961
      %v963 = vrot.slane %v956, %v962
      %v965 = vlaneseq
      %vm966 = vcmp.ge.s32.totalorder %v965, 0
      %vm967 = vcmp.lt.s32.totalorder %v965, 256
      %vm968 = vmand %vm966, %vm967
      %969 = vst.msk [vmem:[%s260] sm:$0x3] %vm968, %v963
      %s970 = smul.u32 2, %s21
      %p971 = scmp.lt.s32.totalorder %s20, 1
      %s972 = scalar_select %p971, %s20, 1
      %p973 = scmp.lt.s32.totalorder %s970, 1
      %s974 = scalar_select %p973, %s970, 1
      %s975 = smul.addr %s972, 2
      %s976 = sadd.s32 %s974, %s975
      %s977 = scalar_lea.vmem %s5, %s976
      // Predicated region
      $region41: #{spgen_forward.1} parent=39 // pred_check
        %p978 = pneg %p160
      $region42: #{spgen_forward.1} parent=39 // pred_check_branch
        %980 = sbr.rel (%p978) target = $region44
      $region43: #{spgen_forward.1} parent=39 // pred_region
        %s981 = smul.u32 2, %s21
      $region44: #{spgen_forward.1} parent=39 // pred_fallthru
        _
    $region40: #{spgen_forward.1} parent=5 // pred_fallthru
      _
    %p982 = scmp.le.s32.totalorder 2, %s11
    // Predicated region
    $region45: #{spgen_forward.1} parent=5 // pred_check
      %p983 = pneg %p982
    $region46: #{spgen_forward.1} parent=5 // pred_check_branch
      %985 = sbr.rel (%p983) target = $region48
    $region47: #{spgen_forward.1} parent=5 // pred_region
      %s986 = ssub.s32 %s11, 2
      // Predicated region
      $region49: #{spgen_forward.1} parent=47 // pred_check
        %p987 = pneg %p166
      $region50: #{spgen_forward.1} parent=47 // pred_check_branch
        %989 = sbr.rel (%p987) target = $region52
      $region51: #{spgen_forward.1} parent=47 // pred_region
        %s990 = smul.u32 2, %s23
        %p991 = scmp.lt.s32.totalorder %s22, 1
        %s992 = scalar_select %p991, %s22, 1
        %p993 = scmp.lt.s32.totalorder %s990, 1
        %s994 = scalar_select %p993, %s990, 1
        %s995 = smul.addr %s992, 2
        %s996 = sadd.s32 %s994, %s995
        %s997 = scalar_lea.vmem %s5, %s996
      $region52: #{spgen_forward.1} parent=47 // pred_fallthru
        _
    $region48: #{spgen_forward.1} parent=5 // pred_fallthru
      _
  $region6: #{spgen_forward.1} parent=0 // loop_footer
    %s15 = sadd.s32 1, %s11
  $region7: #{spgen_forward.1} parent=0 // loop_footer_branch
    %10 = sbr.rel target = $region3
  $region8: #{spgen_forward.1} parent=0 // loop_exit
    _

</llo_original>
